<compile_context>
chip_gen: v5e
topology: v5e:2x2
jax: 0.10.0
libtpu: 0.0.40
codegen_flags: <defaults>
</compile_context>

<pallas_src>
import jax
import jax.numpy as jnp
from jax import lax
from jax.experimental import pallas as pl
from jax.experimental.pallas import tpu as pltpu

EPS = 1e-12          # F.normalize default eps
EPS2 = EPS * EPS     # clamping the squared norm at EPS^2 == clamping the norm at EPS


def _make_netvlad_kernel(normalize_input: bool, matmul_dtype):
    def kernel(x_ref, w_ref, b_ref, cent_ref, out_ref, agg_ref, s_ref):
        # x_ref:    (1, C, HW_t)  channels-first tile of one batch element
        # w_ref:    (K, C)        1x1 conv weight
        # b_ref:    (K, 1)        conv bias
        # cent_ref: (K, C)        cluster centroids
        # out_ref:  (1, K, C)     VLAD descriptor (written on the last HW tile)
        # agg_ref:  (K, C) f32    running sum_p a[k,p] * x[c,p]
        # s_ref:    (K, 1) f32    running sum_p a[k,p]
        t = pl.program_id(1)

        @pl.when(t == 0)
        def _init():
            agg_ref[...] = jnp.zeros_like(agg_ref)
            s_ref[...] = jnp.zeros_like(s_ref)

        x = x_ref[0].astype(jnp.float32)                       # (C, HW_t)

        if normalize_input:
            # L2-normalize each spatial position over channels (PyTorch dim=1).
            ss = jnp.sum(x * x, axis=0, keepdims=True)         # (1, HW_t)
            x = x * lax.rsqrt(jnp.maximum(ss, EPS2))

        # MXU operands: cast once per tile; accumulate in f32.
        xm = x.astype(matmul_dtype)                            # (C, HW_t)
        wm = w_ref[...].astype(matmul_dtype)                   # (K, C)

        # 1x1 conv == matmul over channels: logits (K, HW_t)
        logits = lax.dot_general(
            wm, xm, dimension_numbers=(((1,), (0,)), ((), ())),
            preferred_element_type=jnp.float32)
        logits = logits + b_ref[...]                           # (K,1) broadcast

        # softmax over the cluster axis (sublane axis K)
        logits = logits - jnp.max(logits, axis=0, keepdims=True)
        e = jnp.exp(logits)
        inv_den = pl.reciprocal(jnp.sum(e, axis=0, keepdims=True), approx=True)
        a = e * inv_den                                        # (K, HW_t)

        # accumulate: agg[k,c] += sum_p a[k,p]*x[c,p] ; s[k] += sum_p a[k,p]
        am = a.astype(matmul_dtype)
        agg_ref[...] += lax.dot_general(
            am, xm, dimension_numbers=(((1,), (1,)), ((), ())),
            preferred_element_type=jnp.float32)                # (K, C)
        s_ref[...] += jnp.sum(a, axis=1, keepdims=True)        # (K, 1)

        @pl.when(t == pl.num_programs(1) - 1)
        def _finalize():
            cent = cent_ref[...].astype(jnp.float32)           # (K, C)
            vlad = agg_ref[...] - s_ref[...] * cent            # (K, C)

            # intra-normalization (per cluster, over channels)
            vn2 = jnp.sum(vlad * vlad, axis=1, keepdims=True)  # (K, 1)
            vlad = vlad * lax.rsqrt(jnp.maximum(vn2, EPS2))

            # global L2 norm over the flattened (K*C,) descriptor
            g2 = jnp.sum(vlad * vlad)
            vlad = vlad * lax.rsqrt(jnp.maximum(g2, EPS2))

            out_ref[0] = vlad.astype(out_ref.dtype)

    return kernel


def _pick_hw_tile(hw: int) -> int:
    # Prefer a 128-multiple tile of ~512-1024 rows (85%+ of HBM roofline,
    # bounded VMEM); fall back to the full spatial extent when it does not
    # divide evenly (block last dim must be a multiple of 128 or the full dim).
    for t in (1024, 512, 256, 128):
        if hw % t == 0:
            return t
    return hw


def netvlad_forward(x_nchw, conv_w, conv_b, centroids, *,
                    normalize_input=True, matmul_dtype=jnp.bfloat16,
                    hw_tile=None):
    """x_nchw: (N, C, H, W) float32.  Returns (N, K*C) float32."""
    N, C, H, W = x_nchw.shape
    K = centroids.shape[0]
    HW = H * W

    # NCHW -> (N, C, HW): pure reshape, NO transpose (no extra HBM pass).
    x = x_nchw.reshape(N, C, HW)
    w = conv_w.reshape(K, C).astype(jnp.float32)       # (K, C, 1, 1) -> (K, C)
    b = conv_b.reshape(K, 1).astype(jnp.float32)       # (K,) -> (K, 1)
    cent = centroids.astype(jnp.float32)

    if hw_tile is None:
        hw_tile = _pick_hw_tile(HW)
    assert HW % hw_tile == 0, (HW, hw_tile)
    n_hw_tiles = HW // hw_tile

    kernel = _make_netvlad_kernel(normalize_input, matmul_dtype)

    itemsize = 4
    cost = pl.CostEstimate(
        flops=4 * N * HW * C * K,                      # two matmuls
        transcendentals=N * HW * (K + 2),              # exp + rsqrt/reciprocal
        bytes_accessed=(x.size + N * K * C + w.size + b.size + cent.size) * itemsize,
    )

    out = pl.pallas_call(
        kernel,
        out_shape=jax.ShapeDtypeStruct((N, K, C), jnp.float32),
        grid_spec=pltpu.PrefetchScalarGridSpec(
            num_scalar_prefetch=0,
            grid=(N, n_hw_tiles),
            in_specs=[
                pl.BlockSpec((1, C, hw_tile), lambda n, t: (n, 0, t)),
                pl.BlockSpec((K, C), lambda n, t: (0, 0)),
                pl.BlockSpec((K, 1), lambda n, t: (0, 0)),
                pl.BlockSpec((K, C), lambda n, t: (0, 0)),
            ],
            out_specs=pl.BlockSpec((1, K, C), lambda n, t: (n, 0, 0)),
            scratch_shapes=[
                pltpu.VMEM((K, C), jnp.float32),   # agg accumulator
                pltpu.VMEM((K, 1), jnp.float32),   # soft-assign mass accumulator
            ],
        ),
        compiler_params=pltpu.CompilerParams(
            dimension_semantics=("parallel", "arbitrary"),
            # Explicit VMEM budget: leaves headroom under v7x's 64 MiB physical VMEM.
            vmem_limit_bytes=48 * 1024 * 1024,
        ),
        cost_estimate=cost,
    )(x, w, b, cent)

    # flatten (free reshape); the global L2 norm was already applied in-kernel.
    return out.reshape(N, K * C)


def netvlad_reference(x_nchw, conv_w, conv_b, centroids, *, normalize_input=True):
    """Pure-JAX reference mirroring the PyTorch forward."""
    N, C, H, W = x_nchw.shape
    K = centroids.shape[0]
    x = x_nchw
    if normalize_input:
        nrm = jnp.sqrt(jnp.sum(x * x, axis=1, keepdims=True))
        x = x / jnp.maximum(nrm, EPS)
    w = conv_w.reshape(K, C)
    logits = jnp.einsum('nchw,kc->nkhw', x, w) + conv_b[None, :, None, None]
    sa = logits.reshape(N, K, -1)
    sa = jax.nn.softmax(sa, axis=1)                            # (N, K, HW)
    xf = x.reshape(N, C, -1)                                   # (N, C, HW)
    vlad = jnp.einsum('nkp,ncp->nkc', sa, xf) \
        - jnp.sum(sa, axis=-1)[:, :, None] * centroids[None, :, :]
    vn = jnp.sqrt(jnp.sum(vlad * vlad, axis=2, keepdims=True))
    vlad = vlad / jnp.maximum(vn, EPS)
    vlad = vlad.reshape(N, -1)
    g = jnp.sqrt(jnp.sum(vlad * vlad, axis=1, keepdims=True))
    return vlad / jnp.maximum(g, EPS)


if __name__ == "__main__":
    # Small deterministic config; dim=128 is the NetVLAD module default.
    N, dim, num_clusters, H, W = 2, 128, 16, 8, 8

    key = jax.random.PRNGKey(0)
    k_x, k_w, k_b, k_c = jax.random.split(key, 4)

    x = jax.random.normal(k_x, (N, dim, H, W), dtype=jnp.float32)
    # nn.Conv2d(dim, num_clusters, 1, bias=True): weight (K, C, 1, 1), bias (K,)
    conv_w = jax.random.normal(k_w, (num_clusters, dim, 1, 1), jnp.float32) * 0.1
    conv_b = jax.random.normal(k_b, (num_clusters,), jnp.float32) * 0.1
    # centroids = torch.rand(K, dim)
    centroids = jax.random.uniform(k_c, (num_clusters, dim), jnp.float32)

    ref = netvlad_reference(x, conv_w, conv_b, centroids)

    # Full-precision MXU path: tight check against the pure-JAX reference.
    out_f32 = jax.block_until_ready(
        netvlad_forward(x, conv_w, conv_b, centroids, matmul_dtype=jnp.float32))
    assert out_f32.shape == (N, num_clusters * dim)
    assert jnp.allclose(out_f32, ref, atol=2e-3, rtol=2e-3), "f32 path mismatch"

    # Default bf16-MXU path (v6e/v7x perf): looser tolerance for bf16 rounding.
    out_bf16 = jax.block_until_ready(netvlad_forward(x, conv_w, conv_b, centroids))
    assert out_bf16.shape == (N, num_clusters * dim)
    assert jnp.allclose(out_bf16, ref, atol=3e-2, rtol=3e-2), "bf16 path mismatch"

    print("KERNEL_OK")
</pallas_src>

<mosaic_0001>
module attributes {stable_mosaic.version = 11 : i64} {
  func.func @kernel(%arg0: i32, %arg1: i32, %arg2: memref<1x128x64xf32, #tpu.memory_space<vmem>>, %arg3: memref<16x128xf32, #tpu.memory_space<vmem>>, %arg4: memref<16x1xf32, #tpu.memory_space<vmem>>, %arg5: memref<16x128xf32, #tpu.memory_space<vmem>>, %arg6: memref<1x16x128xf32, #tpu.memory_space<vmem>>, %arg7: memref<16x128xf32, #tpu.memory_space<vmem>>, %arg8: memref<16x1xf32, #tpu.memory_space<vmem>>) attributes {dimension_semantics = [#tpu.dimension_semantics<parallel>, #tpu.dimension_semantics<arbitrary>], iteration_bounds = array<i64: 2, 1>, scalar_prefetch = 0 : i64, scratch_operands = 2 : i64, tpu.core_type = #tpu.core_type<tc>, window_params = [{transform_indices = @transform_0, window_bounds = array<i64: 1, 128, 64>}, {pipeline_mode = #tpu.pipeline_mode<synchronous>, transform_indices = @transform_1, window_bounds = array<i64: 16, 128>}, {pipeline_mode = #tpu.pipeline_mode<synchronous>, transform_indices = @transform_2, window_bounds = array<i64: 16, 1>}, {pipeline_mode = #tpu.pipeline_mode<synchronous>, transform_indices = @transform_3, window_bounds = array<i64: 16, 128>}, {transform_indices = @transform_4, window_bounds = array<i64: 1, 16, 128>}]} {
    %c0_i32 = arith.constant 0 : i32
    %0 = arith.cmpi eq, %arg1, %c0_i32 : i32
    %1 = arith.extui %0 : i1 to i32
    %c0_i32_0 = arith.constant 0 : i32
    %2 = arith.cmpi ne, %1, %c0_i32_0 : i32
    scf.if %2 {
      %cst_23 = arith.constant 0.000000e+00 : f32
      %40 = vector.broadcast %cst_23 : f32 to vector<16x128xf32>
      %c0_24 = arith.constant 0 : index
      %c0_25 = arith.constant 0 : index
      %41 = vector.load %arg7[%c0_24, %c0_25] : memref<16x128xf32, #tpu.memory_space<vmem>>, vector<16x128xf32>
      tpu.vector_store %arg7[%c0_24, %c0_25], %40 {strides = array<i32>} : memref<16x128xf32, #tpu.memory_space<vmem>>, vector<16x128xf32>,
      %cst_26 = arith.constant 0.000000e+00 : f32
      %42 = vector.broadcast %cst_26 : f32 to vector<16x1xf32>
      %c0_27 = arith.constant 0 : index
      %c0_28 = arith.constant 0 : index
      %43 = vector.load %arg8[%c0_27, %c0_28] : memref<16x1xf32, #tpu.memory_space<vmem>>, vector<16x1xf32>
      tpu.vector_store %arg8[%c0_27, %c0_28], %42 {strides = array<i32>} : memref<16x1xf32, #tpu.memory_space<vmem>>, vector<16x1xf32>,
    } else {
    }
    %c0 = arith.constant 0 : index
    %c0_1 = arith.constant 0 : index
    %c0_2 = arith.constant 0 : index
    %3 = vector.load %arg2[%c0, %c0_1, %c0_2] : memref<1x128x64xf32, #tpu.memory_space<vmem>>, vector<1x128x64xf32>
    %4 = vector.shape_cast %3 : vector<1x128x64xf32> to vector<128x64xf32>
    %5 = arith.mulf %4, %4 : vector<128x64xf32>
    %cst = arith.constant dense<0.000000e+00> : vector<64xf32>
    %6 = vector.multi_reduction <add>, %5, %cst [0] : vector<128x64xf32> to vector<64xf32>
    %7 = vector.shape_cast %6 : vector<64xf32> to vector<1x64xf32>
    %cst_3 = arith.constant 1.000000e-24 : f32
    %8 = vector.broadcast %cst_3 : f32 to vector<1x64xf32>
    %9 = arith.maximumf %7, %8 : vector<1x64xf32>
    %10 = math.rsqrt %9 : vector<1x64xf32>
    %11 = vector.broadcast %10 : vector<1x64xf32> to vector<128x64xf32>
    %12 = arith.mulf %4, %11 : vector<128x64xf32>
    %c0_4 = arith.constant 0 : index
    %c0_5 = arith.constant 0 : index
    %13 = vector.load %arg3[%c0_4, %c0_5] : memref<16x128xf32, #tpu.memory_space<vmem>>, vector<16x128xf32>
    %cst_6 = arith.constant dense<0.000000e+00> : vector<16x64xf32>
    %14 = tpu.matmul %13, %12, %cst_6 {dimension_numbers = #tpu.dot_dimension_numbers<[1], [0], [0], [1], [0, 0, 1, 1], [], []>} : vector<16x128xf32>, vector<128x64xf32>, vector<16x64xf32> -> vector<16x64xf32>
    %c0_7 = arith.constant 0 : index
    %c0_8 = arith.constant 0 : index
    %15 = vector.load %arg4[%c0_7, %c0_8] : memref<16x1xf32, #tpu.memory_space<vmem>>, vector<16x1xf32>
    %16 = vector.broadcast %15 : vector<16x1xf32> to vector<16x64xf32>
    %17 = arith.addf %14, %16 : vector<16x64xf32>
    %cst_9 = arith.constant dense<0xFF800000> : vector<64xf32>
    %18 = vector.multi_reduction <maximumf>, %17, %cst_9 [0] : vector<16x64xf32> to vector<64xf32>
    %19 = vector.shape_cast %18 : vector<64xf32> to vector<1x64xf32>
    %20 = vector.broadcast %19 : vector<1x64xf32> to vector<16x64xf32>
    %21 = arith.subf %17, %20 : vector<16x64xf32>
    %22 = math.exp %21 : vector<16x64xf32>
    %cst_10 = arith.constant dense<0.000000e+00> : vector<64xf32>
    %23 = vector.multi_reduction <add>, %22, %cst_10 [0] : vector<16x64xf32> to vector<64xf32>
    %24 = vector.shape_cast %23 : vector<64xf32> to vector<1x64xf32>
    %25 = tpu.reciprocal %24 {approx = true} : vector<1x64xf32> -> vector<1x64xf32>
    %26 = vector.broadcast %25 : vector<1x64xf32> to vector<16x64xf32>
    %27 = arith.mulf %22, %26 : vector<16x64xf32>
    %c0_11 = arith.constant 0 : index
    %c0_12 = arith.constant 0 : index
    %28 = vector.load %arg7[%c0_11, %c0_12] : memref<16x128xf32, #tpu.memory_space<vmem>>, vector<16x128xf32>
    %cst_13 = arith.constant dense<0.000000e+00> : vector<16x128xf32>
    %29 = tpu.matmul %27, %12, %cst_13 {dimension_numbers = #tpu.dot_dimension_numbers<[1], [1], [0], [0], [0, 0, 1, 0], [], []>} : vector<16x64xf32>, vector<128x64xf32>, vector<16x128xf32> -> vector<16x128xf32>
    %30 = arith.addf %28, %29 : vector<16x128xf32>
    %c0_14 = arith.constant 0 : index
    %c0_15 = arith.constant 0 : index
    %31 = vector.load %arg7[%c0_14, %c0_15] : memref<16x128xf32, #tpu.memory_space<vmem>>, vector<16x128xf32>
    tpu.vector_store %arg7[%c0_14, %c0_15], %30 {strides = array<i32>} : memref<16x128xf32, #tpu.memory_space<vmem>>, vector<16x128xf32>,
    %c0_16 = arith.constant 0 : index
    %c0_17 = arith.constant 0 : index
    %32 = vector.load %arg8[%c0_16, %c0_17] : memref<16x1xf32, #tpu.memory_space<vmem>>, vector<16x1xf32>
    %cst_18 = arith.constant dense<0.000000e+00> : vector<16xf32>
    %33 = vector.multi_reduction <add>, %27, %cst_18 [1] : vector<16x64xf32> to vector<16xf32>
    %34 = vector.shape_cast %33 : vector<16xf32> to vector<16x1xf32>
    %35 = arith.addf %32, %34 : vector<16x1xf32>
    %c0_19 = arith.constant 0 : index
    %c0_20 = arith.constant 0 : index
    %36 = vector.load %arg8[%c0_19, %c0_20] : memref<16x1xf32, #tpu.memory_space<vmem>>, vector<16x1xf32>
    tpu.vector_store %arg8[%c0_19, %c0_20], %35 {strides = array<i32>} : memref<16x1xf32, #tpu.memory_space<vmem>>, vector<16x1xf32>,
    %c0_i32_21 = arith.constant 0 : i32
    %37 = arith.cmpi eq, %arg1, %c0_i32_21 : i32
    %38 = arith.extui %37 : i1 to i32
    %c0_i32_22 = arith.constant 0 : i32
    %39 = arith.cmpi ne, %38, %c0_i32_22 : i32
    scf.if %39 {
      %c0_23 = arith.constant 0 : index
      %c0_24 = arith.constant 0 : index
      %40 = vector.load %arg5[%c0_23, %c0_24] : memref<16x128xf32, #tpu.memory_space<vmem>>, vector<16x128xf32>
      %c0_25 = arith.constant 0 : index
      %c0_26 = arith.constant 0 : index
      %41 = vector.load %arg7[%c0_25, %c0_26] : memref<16x128xf32, #tpu.memory_space<vmem>>, vector<16x128xf32>
      %c0_27 = arith.constant 0 : index
      %c0_28 = arith.constant 0 : index
      %42 = vector.load %arg8[%c0_27, %c0_28] : memref<16x1xf32, #tpu.memory_space<vmem>>, vector<16x1xf32>
      %43 = vector.broadcast %42 : vector<16x1xf32> to vector<16x128xf32>
      %44 = arith.mulf %43, %40 : vector<16x128xf32>
      %45 = arith.subf %41, %44 : vector<16x128xf32>
      %46 = arith.mulf %45, %45 : vector<16x128xf32>
      %cst_29 = arith.constant dense<0.000000e+00> : vector<16xf32>
      %47 = vector.multi_reduction <add>, %46, %cst_29 [1] : vector<16x128xf32> to vector<16xf32>
      %48 = vector.shape_cast %47 : vector<16xf32> to vector<16x1xf32>
      %cst_30 = arith.constant 1.000000e-24 : f32
      %49 = vector.broadcast %cst_30 : f32 to vector<16x1xf32>
      %50 = arith.maximumf %48, %49 : vector<16x1xf32>
      %51 = math.rsqrt %50 : vector<16x1xf32>
      %52 = vector.broadcast %51 : vector<16x1xf32> to vector<16x128xf32>
      %53 = arith.mulf %45, %52 : vector<16x128xf32>
      %54 = arith.mulf %53, %53 : vector<16x128xf32>
      %55 = vector.shape_cast %54 : vector<16x128xf32> to vector<1x16x128xf32>
      %cst_31 = arith.constant dense<0.000000e+00> : vector<1xf32>
      %56 = vector.multi_reduction <add>, %55, %cst_31 [1, 2] : vector<1x16x128xf32> to vector<1xf32>
      %57 = vector.shape_cast %56 : vector<1xf32> to vector<1x1x1xf32>
      %58 = vector.extract %57[0, 0, 0] : f32 from vector<1x1x1xf32>
      %cst_32 = arith.constant 1.000000e-24 : f32
      %59 = arith.maximumf %58, %cst_32 : f32
      %60 = math.rsqrt %59 : f32
      %61 = vector.broadcast %60 : f32 to vector<16x128xf32>
      %62 = arith.mulf %53, %61 : vector<16x128xf32>
      %c0_33 = arith.constant 0 : index
      %c0_34 = arith.constant 0 : index
      %c0_35 = arith.constant 0 : index
      %63 = vector.load %arg6[%c0_33, %c0_34, %c0_35] : memref<1x16x128xf32, #tpu.memory_space<vmem>>, vector<1x16x128xf32>
      %64 = vector.shape_cast %63 : vector<1x16x128xf32> to vector<16x128xf32>
      %65 = vector.shape_cast %62 : vector<16x128xf32> to vector<1x16x128xf32>
      tpu.vector_store %arg6[%c0_33, %c0_34, %c0_35], %65 {strides = array<i32>} : memref<1x16x128xf32, #tpu.memory_space<vmem>>, vector<1x16x128xf32>,
    } else {
    }
    return
  }
  func.func @transform_0(%arg0: i32, %arg1: i32) -> (i32, i32, i32) {
    %c0_i32 = arith.constant 0 : i32
    %c0_i32_0 = arith.constant 0 : i32
    return %arg0, %c0_i32, %arg1 : i32, i32, i32
  }
  func.func @transform_1(%arg0: i32, %arg1: i32) -> (i32, i32) {
    %c0_i32 = arith.constant 0 : i32
    %c0_i32_0 = arith.constant 0 : i32
    %c0_i32_1 = arith.constant 0 : i32
    return %c0_i32, %c0_i32_0 : i32, i32
  }
  func.func @transform_2(%arg0: i32, %arg1: i32) -> (i32, i32) {
    %c0_i32 = arith.constant 0 : i32
    %c0_i32_0 = arith.constant 0 : i32
    %c0_i32_1 = arith.constant 0 : i32
    return %c0_i32, %c0_i32_0 : i32, i32
  }
  func.func @transform_3(%arg0: i32, %arg1: i32) -> (i32, i32) {
    %c0_i32 = arith.constant 0 : i32
    %c0_i32_0 = arith.constant 0 : i32
    %c0_i32_1 = arith.constant 0 : i32
    return %c0_i32, %c0_i32_0 : i32, i32
  }
  func.func @transform_4(%arg0: i32, %arg1: i32) -> (i32, i32, i32) {
    %c0_i32 = arith.constant 0 : i32
    %c0_i32_0 = arith.constant 0 : i32
    %c0_i32_1 = arith.constant 0 : i32
    return %arg0, %c0_i32, %c0_i32_0 : i32, i32, i32
  }
}

</mosaic_0001>

<llo_original>
// kernel: tpu_custom_call.1
$region0: #{tpu_custom_call.1}
  #allocation0 [shape = 'u32[]', space=smem, size = 0x4, offset = 0x4, fixed_abs, tag = 'smem constant byte address 0x4 - core index']
  #allocation1 [shape = 'u32[72,128]{1,0:T(1,128)}', space=vmem, size = 0x9000, scoped, tag = 'internal scratch']
  #allocation2 [shape = 'f32[16,128]{1,0:T(8,128)}', space=vmem, size = 0x2000, scoped, tag = 'scratch operand']
  #allocation3 [shape = 'f32[16,1]{1,0:T(8,128)}', space=vmem, size = 0x2000, scoped, tag = 'scratch operand']
  %s0 = inlined_call_operand.vmem [shape: f32[2,128,64], index: 0, kind: input, shape index: {}]
  %s1 = inlined_call_operand.vmem [shape: f32[16,128], index: 1, kind: input, shape index: {}]
  %s2 = inlined_call_operand.vmem [shape: f32[16,1], index: 2, kind: input, shape index: {}]
  %s3 = inlined_call_operand.vmem [shape: f32[16,128], index: 3, kind: input, shape index: {}]
  %s4 = inlined_call_operand.hbm [shape: f32[2,16,128], index: 4, kind: output, shape index: {}]
  %s5 = sld [smem:[#allocation0]]
  $region57: #{tpu_custom_call.1} parent=0
    _
  %s7 = ssub.s32 1, %s5
  %s8 = scalar_select 0, %s7, %s5
  $region1: #{tpu_custom_call.1} parent=0
    #allocation4 [shape = 'u8[16384]{0}', space=vmem, size = 0x4000, scoped, tag = 'output window, operand 0']
    #allocation5 [shape = 's32[2]{0}', space=sflag, size = 0x8, scoped, tag = 'scoped memory for tpu_custom_call.1']
    %9 = vsyncpa [#allocation5], 0
    %s10 = scalar_lea.sflag [#allocation5], 1
    %11 = vsyncpa %s10, 0
    loop: start=0, step=1, limit=4
    $region2: #{tpu_custom_call.1} parent=1 // loop_pre_header
      _
    $region3: #{tpu_custom_call.1} parent=1 // loop_header
      %s13 = sphi 0, %s17
      %p14 = scmp.ge.s32.totalorder %s13, 4
      %s20 = sphi 0, %s32
      %s21 = sphi 0, %s28
      %s22 = sphi 0, %s20
      %s23 = sphi 0, %s21
      %s24 = sphi 0, %s22
      %s25 = sphi 0, %s23
      %s37 = sphi 0, %s39
      %s40 = sphi 0, %s37
      %s41 = sphi 0, %s40
      %s57 = sphi 0, %s41
      %s61 = sphi 0, %s61
      %s63 = sphi 0, %s61
      %s64 = sphi 0, %s63
      %s78 = sphi 0, %s64
      %s82 = sphi 0, %s82
      %s84 = sphi 0, %s82
      %s85 = sphi 0, %s84
      %s99 = sphi 0, %s85
      %s103 = sphi 0, %s103
      %s105 = sphi 0, %s103
      %s106 = sphi 0, %s105
      %s120 = sphi 0, %s106
      %s126 = sphi 0, %s128
      %s129 = sphi 0, %s126
      %s130 = sphi 0, %s129
      %s146 = sphi 0, %s130
    $region4: #{tpu_custom_call.1} parent=1 // loop_header_branch
      %16 = sbr.rel (%p14) target = $region8
    $region5: #{tpu_custom_call.1} parent=1 // loop_body
      %s18 = ssub.s32 %s13, 1
      %s19 = ssub.s32 %s13, 2
      %s26 = sadd.s32 1, %s21
      %p27 = scmp.ge.s32.totalorder %s26, 1
      %s28 = scalar_select %p27, 0, %s26
      %s29 = sadd.s32 1, %s20
      %s30 = scalar_select %p27, %s29, %s20
      %p31 = scmp.ge.s32.totalorder %s30, 2
      %s32 = scalar_select %p31, 0, %s30
      %s33 = ssub.s32 %s20, %s32
      %s34 = ssub.s32 %s21, %s28
      %s35 = sor.u32 %s33, %s34
      %p36 = scmp.eq.s32.totalorder %s35, 0
      %s38 = sadd.s32 %s37, 1
      %s39 = scalar_select %p36, %s37, %s38
      %p42 = pneg %p36
      %p43 = scmp.eq.s32.totalorder %s13, 1
      %p44 = por %p42, %p43
      %p45 = scmp.ne.s32.totalorder %s37, %s40
      %p46 = scmp.eq.s32.totalorder %s13, 0
      %p47 = por %p45, %p46
      %p48 = scmp.ne.s32.totalorder %s37, %s40
      %p49 = scmp.eq.s32.totalorder %s18, 1
      %p50 = por %p48, %p49
      %p51 = scmp.ne.s32.totalorder %s40, %s41
      %p52 = scmp.eq.s32.totalorder %s18, 0
      %p53 = por %p51, %p52
      %p54 = scmp.ne.s32.totalorder %s40, %s41
      %p55 = scmp.eq.s32.totalorder %s19, 1
      %p56 = por %p54, %p55
      %p58 = scmp.ne.s32.totalorder %s41, %s57
      %p59 = scmp.eq.s32.totalorder %s19, 0
      %p60 = por %p58, %p59
      %s62 = sadd.s32 %s61, 1
      %p65 = scmp.eq.s32.totalorder %s13, 1
      %p66 = scmp.ne.s32.totalorder %s61, %s63
      %p67 = scmp.eq.s32.totalorder %s13, 0
      %p68 = por %p66, %p67
      %p69 = scmp.ne.s32.totalorder %s61, %s63
      %p70 = scmp.eq.s32.totalorder %s18, 1
      %p71 = por %p69, %p70
      %p72 = scmp.ne.s32.totalorder %s63, %s64
      %p73 = scmp.eq.s32.totalorder %s18, 0
      %p74 = por %p72, %p73
      %p75 = scmp.ne.s32.totalorder %s63, %s64
      %p76 = scmp.eq.s32.totalorder %s19, 1
      %p77 = por %p75, %p76
      %p79 = scmp.ne.s32.totalorder %s64, %s78
      %p80 = scmp.eq.s32.totalorder %s19, 0
      %p81 = por %p79, %p80
      %s83 = sadd.s32 %s82, 1
      %p86 = scmp.eq.s32.totalorder %s13, 1
      %p87 = scmp.ne.s32.totalorder %s82, %s84
      %p88 = scmp.eq.s32.totalorder %s13, 0
      %p89 = por %p87, %p88
      %p90 = scmp.ne.s32.totalorder %s82, %s84
      %p91 = scmp.eq.s32.totalorder %s18, 1
      %p92 = por %p90, %p91
      %p93 = scmp.ne.s32.totalorder %s84, %s85
      %p94 = scmp.eq.s32.totalorder %s18, 0
      %p95 = por %p93, %p94
      %p96 = scmp.ne.s32.totalorder %s84, %s85
      %p97 = scmp.eq.s32.totalorder %s19, 1
      %p98 = por %p96, %p97
      %p100 = scmp.ne.s32.totalorder %s85, %s99
      %p101 = scmp.eq.s32.totalorder %s19, 0
      %p102 = por %p100, %p101
      %s104 = sadd.s32 %s103, 1
      %p107 = scmp.eq.s32.totalorder %s13, 1
      %p108 = scmp.ne.s32.totalorder %s103, %s105
      %p109 = scmp.eq.s32.totalorder %s13, 0
      %p110 = por %p108, %p109
      %p111 = scmp.ne.s32.totalorder %s103, %s105
      %p112 = scmp.eq.s32.totalorder %s18, 1
      %p113 = por %p111, %p112
      %p114 = scmp.ne.s32.totalorder %s105, %s106
      %p115 = scmp.eq.s32.totalorder %s18, 0
      %p116 = por %p114, %p115
      %p117 = scmp.ne.s32.totalorder %s105, %s106
      %p118 = scmp.eq.s32.totalorder %s19, 1
      %p119 = por %p117, %p118
      %p121 = scmp.ne.s32.totalorder %s106, %s120
      %p122 = scmp.eq.s32.totalorder %s19, 0
      %p123 = por %p121, %p122
      %s124 = ssub.s32 %s20, %s32
      %p125 = scmp.eq.s32.totalorder %s124, 0
      %s127 = sadd.s32 %s126, 1
      %s128 = scalar_select %p125, %s126, %s127
      %p131 = pneg %p125
      %p132 = scmp.eq.s32.totalorder %s13, 1
      %p133 = por %p131, %p132
      %p134 = scmp.ne.s32.totalorder %s126, %s129
      %p135 = scmp.eq.s32.totalorder %s13, 0
      %p136 = por %p134, %p135
      %p137 = scmp.ne.s32.totalorder %s126, %s129
      %p138 = scmp.eq.s32.totalorder %s18, 1
      %p139 = por %p137, %p138
      %p140 = scmp.ne.s32.totalorder %s129, %s130
      %p141 = scmp.eq.s32.totalorder %s18, 0
      %p142 = por %p140, %p141
      %p143 = scmp.ne.s32.totalorder %s129, %s130
      %p144 = scmp.eq.s32.totalorder %s19, 1
      %p145 = por %p143, %p144
      %p147 = scmp.ne.s32.totalorder %s130, %s146
      %p148 = scmp.eq.s32.totalorder %s19, 0
      %p149 = por %p147, %p148
      %p150 = scmp.le.s32.totalorder 1, %s13
      %p151 = scmp.lt.s32.totalorder %s13, 3
      %p152 = pnand %p150, %p151
      %p153 = pneg %p152
      // Predicated region
      $region9: #{tpu_custom_call.1} parent=5 // pred_check
        _
      $region10: #{tpu_custom_call.1} parent=5 // pred_check_branch
        %155 = sbr.rel (%p152) target = $region12
      $region11: #{tpu_custom_call.1} parent=5 // pred_region
        %s156 = ssub.s32 %s13, 1
        // Predicated region
        $region13: #{tpu_custom_call.1} parent=11 // pred_check
          %p157 = pneg %p74
        $region14: #{tpu_custom_call.1} parent=11 // pred_check_branch
          %159 = sbr.rel (%p157) target = $region16
        $region15: #{tpu_custom_call.1} parent=11 // pred_region
          _
        $region16: #{tpu_custom_call.1} parent=11 // pred_fallthru
          _
        // Predicated region
        $region17: #{tpu_custom_call.1} parent=11 // pred_check
          %p160 = pneg %p95
        $region18: #{tpu_custom_call.1} parent=11 // pred_check_branch
          %162 = sbr.rel (%p160) target = $region20
        $region19: #{tpu_custom_call.1} parent=11 // pred_region
          _
        $region20: #{tpu_custom_call.1} parent=11 // pred_fallthru
          _
        // Predicated region
        $region21: #{tpu_custom_call.1} parent=11 // pred_check
          %p163 = pneg %p116
        $region22: #{tpu_custom_call.1} parent=11 // pred_check_branch
          %165 = sbr.rel (%p163) target = $region24
        $region23: #{tpu_custom_call.1} parent=11 // pred_region
          _
        $region24: #{tpu_custom_call.1} parent=11 // pred_fallthru
          _
      $region12: #{tpu_custom_call.1} parent=5 // pred_fallthru
        _
      %p166 = scmp.lt.s32.totalorder %s13, 2
      // Predicated region
      $region25: #{tpu_custom_call.1} parent=5 // pred_check
        %p167 = pneg %p166
      $region26: #{tpu_custom_call.1} parent=5 // pred_check_branch
        %169 = sbr.rel (%p167) target = $region28
      $region27: #{tpu_custom_call.1} parent=5 // pred_region
        // Predicated region
        $region29: #{tpu_custom_call.1} parent=27 // pred_check
          %p170 = pneg %p47
        $region30: #{tpu_custom_call.1} parent=27 // pred_check_branch
          %172 = sbr.rel (%p170) target = $region32
        $region31: #{tpu_custom_call.1} parent=27 // pred_region
          %p173 = scmp.lt.s32.totalorder %s20, 1
          %s174 = scalar_select %p173, %s20, 1
          %p175 = scmp.lt.s32.totalorder %s21, 0
          %s176 = scalar_select %p175, %s21, 0
          %s177 = smul.addr %s174, 16
          %s178 = sadd.s32 %s176, %s177
          %s179 = smul.addr %s178, 8
          %s180 = scalar_lea.vmem %s0, %s179
        $region32: #{tpu_custom_call.1} parent=27 // pred_fallthru
          _
      $region28: #{tpu_custom_call.1} parent=5 // pred_fallthru
        _
      %p181 = scmp.le.s32.totalorder 1, %s13
      %p182 = scmp.lt.s32.totalorder %s13, 3
      %p183 = pnand %p181, %p182
      %p184 = pneg %p183
      // Predicated region
      $region33: #{tpu_custom_call.1} parent=5 // pred_check
        _
      $region34: #{tpu_custom_call.1} parent=5 // pred_check_branch
        %186 = sbr.rel (%p183) target = $region36
      $region35: #{tpu_custom_call.1} parent=5 // pred_region
        %s187 = ssub.s32 %s13, 1
        %p188 = scmp.lt.s32.totalorder %s22, 1
        %s189 = scalar_select %p188, %s22, 1
        %p190 = scmp.lt.s32.totalorder %s23, 0
        %s191 = scalar_select %p190, %s23, 0
        %s192 = smul.addr %s189, 16
        %s193 = sadd.s32 %s191, %s192
        %s194 = smul.addr %s193, 8
        %s195 = scalar_lea.vmem %s0, %s194
        %p196 = pneg %p53
        %p197 = pneg %p50
        %p198 = pneg %p74
        %p199 = pneg %p71
        %p200 = pneg %p95
        %p201 = pneg %p92
        %p202 = pneg %p116
        %p203 = pneg %p113
        %p204 = pneg %p142
        %p205 = pneg %p139
        %s206 = sand.u32 %s129, 1
        %s207 = scalar_lea.sflag [#allocation5], %s206
        %s208 = sand.u32 %s129, 1
        %s209 = smul.addr %s208, 16
        %s210 = scalar_lea.vmem [#allocation4], %s209
        %p211 = scmp.lt.s32.totalorder %s22, 1
        %s212 = scalar_select %p211, %s22, 1
        %p213 = scmp.lt.s32.totalorder %s23, 0
        %s214 = scalar_select %p213, %s23, 0
        %s215 = smul.addr %s212, 16
        %s216 = sadd.s32 %s214, %s215
        %s217 = smul.addr %s216, 8
        %s218 = scalar_lea.vmem %s0, %s217
        %p219 = scmp.eq.s32.totalorder %s23, 0
        // Predicated region
        $region37: #{tpu_custom_call.1} parent=35 // pred_check
          %p220 = pneg %p219
        $region38: #{tpu_custom_call.1} parent=35 // pred_check_branch
          %222 = sbr.rel (%p220) target = $region40
        $region39: #{tpu_custom_call.1} parent=35 // pred_region
          %223 = vst [vmem:[#allocation2] sm:$0xff] 0.0
          %224 = vst [vmem:[#allocation2 + $0x8] sm:$0xff] 0.0
          %vm225 = vcmask 7168
          %226 = vst.msk [vmem:[#allocation3] sm:$0xff] %vm225, 0.0
          %227 = vst.msk [vmem:[#allocation3 + $0x8] sm:$0xff] %vm225, 0.0
        $region40: #{tpu_custom_call.1} parent=35 // pred_fallthru
          _
        %v228 = vld [vmem:[%s218] sm:$0xff]
        %v229 = vld [vmem:[%s218 + $0x8] sm:$0xff]
        %v230 = vld [vmem:[%s218 + $0x10] sm:$0xff]
        %v231 = vld [vmem:[%s218 + $0x18] sm:$0xff]
        %v232 = vld [vmem:[%s218 + $0x20] sm:$0xff]
        %v233 = vld [vmem:[%s218 + $0x28] sm:$0xff]
        %v234 = vld [vmem:[%s218 + $0x30] sm:$0xff]
        %v235 = vld [vmem:[%s218 + $0x38] sm:$0xff]
        %v236 = vld [vmem:[%s218 + $0x40] sm:$0xff]
        %v237 = vld [vmem:[%s218 + $0x48] sm:$0xff]
        %v238 = vld [vmem:[%s218 + $0x50] sm:$0xff]
        %v239 = vld [vmem:[%s218 + $0x58] sm:$0xff]
        %v240 = vld [vmem:[%s218 + $0x60] sm:$0xff]
        %v241 = vld [vmem:[%s218 + $0x68] sm:$0xff]
        %v242 = vld [vmem:[%s218 + $0x70] sm:$0xff]
        %v243 = vld [vmem:[%s218 + $0x78] sm:$0xff]
        %v244 = vmul.f32 %v228, %v228
        %v245 = vmul.f32 %v229, %v229
        %v246 = vmul.f32 %v230, %v230
        %v247 = vmul.f32 %v231, %v231
        %v248 = vmul.f32 %v232, %v232
        %v249 = vmul.f32 %v233, %v233
        %v250 = vmul.f32 %v234, %v234
        %v251 = vmul.f32 %v235, %v235
        %v252 = vmul.f32 %v236, %v236
        %v253 = vmul.f32 %v237, %v237
        %v254 = vmul.f32 %v238, %v238
        %v255 = vmul.f32 %v239, %v239
        %v256 = vmul.f32 %v240, %v240
        %v257 = vmul.f32 %v241, %v241
        %v258 = vmul.f32 %v242, %v242
        %v259 = vmul.f32 %v243, %v243
        %vm260 = vcmask 523264
        %v261 = vsel %vm260, %v244, 0.0
        %v262 = vsel %vm260, %v245, 0.0
        %v263 = vadd.f32 %v261, %v262
        %v264 = vsel %vm260, %v246, 0.0
        %v265 = vadd.f32 %v263, %v264
        %v266 = vsel %vm260, %v247, 0.0
        %v267 = vadd.f32 %v265, %v266
        %v268 = vsel %vm260, %v248, 0.0
        %v269 = vadd.f32 %v267, %v268
        %v270 = vsel %vm260, %v249, 0.0
        %v271 = vadd.f32 %v269, %v270
        %v272 = vsel %vm260, %v250, 0.0
        %v273 = vadd.f32 %v271, %v272
        %v274 = vsel %vm260, %v251, 0.0
        %v275 = vadd.f32 %v273, %v274
        %v276 = vsel %vm260, %v252, 0.0
        %v277 = vadd.f32 %v275, %v276
        %v278 = vsel %vm260, %v253, 0.0
        %v279 = vadd.f32 %v277, %v278
        %v280 = vsel %vm260, %v254, 0.0
        %v281 = vadd.f32 %v279, %v280
        %v282 = vsel %vm260, %v255, 0.0
        %v283 = vadd.f32 %v281, %v282
        %v284 = vsel %vm260, %v256, 0.0
        %v285 = vadd.f32 %v283, %v284
        %v286 = vsel %vm260, %v257, 0.0
        %v287 = vadd.f32 %v285, %v286
        %v288 = vsel %vm260, %v258, 0.0
        %v289 = vadd.f32 %v287, %v288
        %v290 = vsel %vm260, %v259, 0.0
        %v291 = vadd.f32 %v289, %v290
        %v292 = vrot.slane %v291, 4
        %v293 = vadd.f32 %v291, %v292
        %v294 = vrot.slane %v293, 2
        %v295 = vadd.f32 %v293, %v294
        %v296 = vrot.slane %v295, 1
        %v297 = vadd.f32 %v295, %v296
        %v298 = vmax.f32 %v297, 1e-24
        %v299 = vrsqrt.pop %v298
        %v300 = vmul.f32 %v299, %v298
        %v301 = vmul.f32 %v300, %v299
        %v302 = vmul.f32 0.5, %v301
        %v303 = vsub.f32 1.5, %v302
        %v304 = vmul.f32 %v299, %v303
        %vm305 = vweird.f32 %v298
        %vm306 = vweird.f32 %v299
        %vm307 = vmor %vm305, %vm306
        %v308 = vsel %vm307, %v299, %v304
        %v309 = vmul.f32 %v228, %v308
        %v310 = vmul.f32 %v229, %v308
        %v311 = vmul.f32 %v230, %v308
        %v312 = vmul.f32 %v231, %v308
        %v313 = vmul.f32 %v232, %v308
        %v314 = vmul.f32 %v233, %v308
        %v315 = vmul.f32 %v234, %v308
        %v316 = vmul.f32 %v235, %v308
        %v317 = vmul.f32 %v236, %v308
        %v318 = vmul.f32 %v237, %v308
        %v319 = vmul.f32 %v238, %v308
        %v320 = vmul.f32 %v239, %v308
        %v321 = vmul.f32 %v240, %v308
        %v322 = vmul.f32 %v241, %v308
        %v323 = vmul.f32 %v242, %v308
        %v324 = vmul.f32 %v243, %v308
        %v325 = vld [vmem:[%s1] sm:$0xff]
        %v326 = vld [vmem:[%s1 + $0x8] sm:$0xff]
        %v327 = vld [vmem:[%s2] sm:$0xff]
        %v328 = vld [vmem:[%s2 + $0x8] sm:$0xff]
        %330 = vset.pattern.permute.xlu0 0
        %331 = vperm.xlu0 %330, %v327
        %v332 = vpop.permute.xlu0 %331
        %335 = vset.pattern.permute.xlu0 0
        %336 = vperm.xlu0 %335, %v328
        %v337 = vpop.permute.xlu0 %336
        %339 = vmatpush.msra.mxu0 %v324
        %340 = vmatpush.msra.mxu0 %v323
        %341 = vmatpush.msra.mxu0 %v322
        %342 = vmatpush.msra.mxu0 %v321
        %343 = vmatpush.msra.mxu0 %v320
        %344 = vmatpush.msra.mxu0 %v319
        %345 = vmatpush.msra.mxu0 %v318
        %346 = vmatpush.msra.mxu0 %v317
        %347 = vmatpush.msra.mxu0 %v316
        %348 = vmatpush.msra.mxu0 %v315
        %349 = vmatpush.msra.mxu0 %v314
        %350 = vmatpush.msra.mxu0 %v313
        %351 = vmatpush.msra.mxu0 %v312
        %352 = vmatpush.msra.mxu0 %v311
        %353 = vmatpush.msra.mxu0 %v310
        %354 = vmatpush.msra.mxu0 %v309
        %355 = vmatmul.f32.gmra.mxu0 %v325
        %v356 = vpop.f32.mrf.mxu0
        %v357 = vadd.f32 %v332, %v356
        %358 = vmatmul.f32.gmra.mxu0 %v326
        %v359 = vpop.f32.mrf.mxu0
        %v360 = vadd.f32 %v337, %v359
        %361 = vdwg.mxu0
        %v362 = vsel %vm260, %v357, -inf
        %v363 = vsel %vm260, %v360, -inf
        %v364 = vmax.f32 %v362, %v363
        %v365 = vrot.slane %v364, 4
        %v366 = vmax.f32 %v364, %v365
        %v367 = vrot.slane %v366, 2
        %v368 = vmax.f32 %v366, %v367
        %v369 = vrot.slane %v368, 1
        %v370 = vmax.f32 %v368, %v369
        %v371 = vsub.f32 %v357, %v370
        %v372 = vsub.f32 %v360, %v370
        %v373 = vmul.f32 %v371, 1.442695
        %v374 = vpow.pop %v373
        %v375 = vmul.f32 %v372, 1.442695
        %v376 = vpow.pop %v375
        %v377 = vsel %vm260, %v374, 0.0
        %v378 = vsel %vm260, %v376, 0.0
        %v379 = vadd.f32 %v377, %v378
        %v380 = vrot.slane %v379, 4
        %v381 = vadd.f32 %v379, %v380
        %v382 = vrot.slane %v381, 2
        %v383 = vadd.f32 %v381, %v382
        %v384 = vrot.slane %v383, 1
        %v385 = vadd.f32 %v383, %v384
        %v386 = vrcp.pop %v385
        %v387 = vmul.f32 %v374, %v386
        %v388 = vmul.f32 %v376, %v386
        %v389 = vld [vmem:[#allocation2] sm:$0xff]
        %v390 = vld [vmem:[#allocation2 + $0x8] sm:$0xff]
        %v392 = vsel %vm260, %v387, 0
        %v395 = vsel %vm260, %v388, 0
        %v398 = vsel %vm260, %v309, 0
        %v401 = vsel %vm260, %v310, 0
        %v404 = vsel %vm260, %v311, 0
        %v407 = vsel %vm260, %v312, 0
        %v410 = vsel %vm260, %v313, 0
        %v413 = vsel %vm260, %v314, 0
        %v416 = vsel %vm260, %v315, 0
        %v419 = vsel %vm260, %v316, 0
        %v422 = vsel %vm260, %v317, 0
        %v425 = vsel %vm260, %v318, 0
        %v428 = vsel %vm260, %v319, 0
        %v431 = vsel %vm260, %v320, 0
        %v434 = vsel %vm260, %v321, 0
        %v437 = vsel %vm260, %v322, 0
        %v440 = vsel %vm260, %v323, 0
        %v443 = vsel %vm260, %v324, 0
        %445 = vmatpush.xpose.msra.mxu0 %v443
        %446 = vmatpush.xpose.msra.mxu0 %v440
        %447 = vmatpush.xpose.msra.mxu0 %v437
        %448 = vmatpush.xpose.msra.mxu0 %v434
        %449 = vmatpush.xpose.msra.mxu0 %v431
        %450 = vmatpush.xpose.msra.mxu0 %v428
        %451 = vmatpush.xpose.msra.mxu0 %v425
        %452 = vmatpush.xpose.msra.mxu0 %v422
        %453 = vmatpush.xpose.msra.mxu0 %v419
        %454 = vmatpush.xpose.msra.mxu0 %v416
        %455 = vmatpush.xpose.msra.mxu0 %v413
        %456 = vmatpush.xpose.msra.mxu0 %v410
        %457 = vmatpush.xpose.msra.mxu0 %v407
        %458 = vmatpush.xpose.msra.mxu0 %v404
        %459 = vmatpush.xpose.msra.mxu0 %v401
        %460 = vmatpush.xpose.msra.mxu0 %v398
        %461 = vmatmul.f32.gmra.mxu0 %v392
        %v462 = vpop.f32.mrf.mxu0
        %v463 = vadd.f32 0.0, %v462
        %464 = vmatmul.f32.gmra.mxu0 %v395
        %v465 = vpop.f32.mrf.mxu0
        %v466 = vadd.f32 0.0, %v465
        %467 = vdwg.mxu0
        %v468 = vadd.f32 %v389, %v463
        %v469 = vadd.f32 %v390, %v466
        %470 = vst [vmem:[#allocation2] sm:$0xff] %v468
        %471 = vst [vmem:[#allocation2 + $0x8] sm:$0xff] %v469
        %v472 = vld [vmem:[#allocation3] sm:$0xff]
        %v473 = vld [vmem:[#allocation3 + $0x8] sm:$0xff]
        %v474 = vsel %vm260, %v387, 0.0
        %475 = vadd.xlane.f32.xlu0 %v474
        %v476 = vpop.xlane.xlu0 %475
        %v477 = vsel %vm260, %v388, 0.0
        %478 = vadd.xlane.f32.xlu0 %v477
        %v479 = vpop.xlane.xlu0 %478
        %v480 = vadd.f32 %v472, %v476
        %v481 = vadd.f32 %v473, %v479
        %vm482 = vcmask 7168
        %483 = vst.msk [vmem:[#allocation3] sm:$0xff] %vm482, %v480
        %484 = vst.msk [vmem:[#allocation3 + $0x8] sm:$0xff] %vm482, %v481
        // Predicated region
        $region41: #{tpu_custom_call.1} parent=35 // pred_check
          %p485 = pneg %p219
        $region42: #{tpu_custom_call.1} parent=35 // pred_check_branch
          %487 = sbr.rel (%p485) target = $region44
        $region43: #{tpu_custom_call.1} parent=35 // pred_region
          %v488 = vld [vmem:[%s3] sm:$0xff]
          %v489 = vld [vmem:[%s3 + $0x8] sm:$0xff]
          %v490 = vld [vmem:[#allocation2] sm:$0xff]
          %v491 = vld [vmem:[#allocation2 + $0x8] sm:$0xff]
          %v492 = vld [vmem:[#allocation3] sm:$0xff]
          %v493 = vld [vmem:[#allocation3 + $0x8] sm:$0xff]
          %495 = vset.pattern.permute.xlu0 0
          %496 = vperm.xlu0 %495, %v492
          %v497 = vpop.permute.xlu0 %496
          %500 = vset.pattern.permute.xlu0 0
          %501 = vperm.xlu0 %500, %v493
          %v502 = vpop.permute.xlu0 %501
          %v504 = vmul.f32 %v497, %v488
          %v505 = vmul.f32 %v502, %v489
          %v506 = vsub.f32 %v490, %v504
          %v507 = vsub.f32 %v491, %v505
          %v508 = vmul.f32 %v506, %v506
          %v509 = vmul.f32 %v507, %v507
          %510 = vadd.xlane.f32.xlu0 %v508
          %v511 = vpop.xlane.xlu0 %510
          %512 = vadd.xlane.f32.xlu0 %v509
          %v513 = vpop.xlane.xlu0 %512
          %v514 = vmax.f32 %v511, 1e-24
          %v515 = vmax.f32 %v513, 1e-24
          %v516 = vrsqrt.pop %v514
          %v517 = vmul.f32 %v516, %v514
          %v518 = vmul.f32 %v517, %v516
          %v519 = vmul.f32 0.5, %v518
          %v520 = vsub.f32 1.5, %v519
          %v521 = vmul.f32 %v516, %v520
          %vm522 = vweird.f32 %v514
          %vm523 = vweird.f32 %v516
          %vm524 = vmor %vm522, %vm523
          %v525 = vsel %vm524, %v516, %v521
          %v526 = vrsqrt.pop %v515
          %v527 = vmul.f32 %v526, %v515
          %v528 = vmul.f32 %v527, %v526
          %v529 = vmul.f32 0.5, %v528
          %v530 = vsub.f32 1.5, %v529
          %v531 = vmul.f32 %v526, %v530
          %vm532 = vweird.f32 %v515
          %vm533 = vweird.f32 %v526
          %vm534 = vmor %vm532, %vm533
          %v535 = vsel %vm534, %v526, %v531
          %v536 = vmul.f32 %v506, %v525
          %v537 = vmul.f32 %v507, %v535
          %v538 = vmul.f32 %v536, %v536
          %v539 = vmul.f32 %v537, %v537
          %v540 = vadd.f32 %v538, %v539
          %541 = vadd.xlane.f32.xlu0 %v540
          %v542 = vpop.xlane.xlu0 %541
          %v543 = vrot.slane %v542, 4
          %v544 = vadd.f32 %v542, %v543
          %v545 = vrot.slane %v544, 2
          %v546 = vadd.f32 %v544, %v545
          %v547 = vrot.slane %v546, 1
          %v548 = vadd.f32 %v546, %v547
          %s549 = vtos %v548
          %s550 = smax.f32 %s549, 1e-24
          %v551 = vstv %s550
          %v552 = vrsqrt.pop %v551
          %v553 = vmul.f32 %v552, %v551
          %v554 = vmul.f32 %v553, %v552
          %v555 = vmul.f32 0.5, %v554
          %v556 = vsub.f32 1.5, %v555
          %v557 = vmul.f32 %v552, %v556
          %vm558 = vweird.f32 %v551
          %vm559 = vweird.f32 %v552
          %vm560 = vmor %vm558, %vm559
          %v561 = vsel %vm560, %v552, %v557
          %s562 = vtos %v561
          %v563 = vstv %s562
          %v564 = vmul.f32 %v536, %v563
          %v565 = vmul.f32 %v537, %v563
          %566 = vst [vmem:[%s210] sm:$0xff] %v564
          %567 = vst [vmem:[%s210 + $0x8] sm:$0xff] %v565
        $region44: #{tpu_custom_call.1} parent=35 // pred_fallthru
          _
        %s568 = sand.u32 %s129, 1
        %s569 = scalar_lea.sflag [#allocation5], %s568
        %s570 = sand.u32 %s129, 1
        %s571 = smul.addr %s570, 16
        %s572 = scalar_lea.vmem [#allocation4], %s571
        // Predicated region
        $region45: #{tpu_custom_call.1} parent=35 // pred_check
          %p573 = pneg %p139
        $region46: #{tpu_custom_call.1} parent=35 // pred_check_branch
          %575 = sbr.rel (%p573) target = $region48
        $region47: #{tpu_custom_call.1} parent=35 // pred_region
          %577 = vsyncadd %s569, 0
          %s578 = smul.addr %s22, 2
          %s579 = smul.addr %s578, 8
          %s580 = scalar_lea.hbm %s4, %s579
          %s581 = sshll.u32 %s572, 4
          %s582 = int_to_ptr.vmem [resolvable:$true] %s581
          %s583 = sshll.u32 %s580, 4
          %s584 = int_to_ptr.hbm [resolvable:$true] %s583
          %589 = dma.vmem_to_hbm [thread:$0]  %s582, 256, %s584, %s569, 128, 128, 8
        $region48: #{tpu_custom_call.1} parent=35 // pred_fallthru
          _
      $region36: #{tpu_custom_call.1} parent=5 // pred_fallthru
        _
      %p590 = scmp.le.s32.totalorder 2, %s13
      // Predicated region
      $region49: #{tpu_custom_call.1} parent=5 // pred_check
        %p591 = pneg %p590
      $region50: #{tpu_custom_call.1} parent=5 // pred_check_branch
        %593 = sbr.rel (%p591) target = $region52
      $region51: #{tpu_custom_call.1} parent=5 // pred_region
        %s594 = ssub.s32 %s13, 2
        // Predicated region
        $region53: #{tpu_custom_call.1} parent=51 // pred_check
          %p595 = pneg %p145
        $region54: #{tpu_custom_call.1} parent=51 // pred_check_branch
          %597 = sbr.rel (%p595) target = $region56
        $region55: #{tpu_custom_call.1} parent=51 // pred_region
          %s598 = sand.u32 %s130, 1
          %s599 = scalar_lea.sflag [#allocation5], %s598
          %s600 = sand.u32 %s130, 1
          %s601 = smul.addr %s600, 16
          %s602 = scalar_lea.vmem [#allocation4], %s601
          %604 = dma.done %s599, 256
        $region56: #{tpu_custom_call.1} parent=51 // pred_fallthru
          _
      $region52: #{tpu_custom_call.1} parent=5 // pred_fallthru
        _
    $region6: #{tpu_custom_call.1} parent=1 // loop_footer
      %s17 = sadd.s32 1, %s13
    $region7: #{tpu_custom_call.1} parent=1 // loop_footer_branch
      %12 = sbr.rel target = $region3
    $region8: #{tpu_custom_call.1} parent=1 // loop_exit
      _
    %605 = vsyncpa [#allocation5], 1
    %s606 = scalar_lea.sflag [#allocation5], 1
    %607 = vsyncpa %s606, 1

</llo_original>
